<compile_context>
chip_gen: v5e
topology: v5e:2x2
jax: 0.10.0
libtpu: 0.0.40
codegen_flags: <defaults>
</compile_context>

<pallas_src>
import functools

import jax
import jax.numpy as jnp
from jax.experimental import pallas as pl
from jax.experimental.pallas import tpu as pltpu

H_A, H_V = 32, 16          # actor / critic hidden widths (from the PyTorch module)
H = H_A + H_V              # fused hidden width = 48
LANES = 128                # slab is padded to one full lane tile


def _round_up(n, m):
    return (n + m - 1) // m * m


# --------------------------------------------------------------------------
# Kernel
# --------------------------------------------------------------------------
def a3c_fused_kernel(x_ref, slab_ref, out_ref, *, s_dim, a_dim, a2):
    """Fused A3C forward: 2 MXU matmuls, everything VMEM-resident.

    slab layout (rows):
      [0, s_dim)          : W1 = [wa1 | wv1]            (cols 0..47)
      [s_dim]             : b1 = [ba1 | bv1]            (cols 0..47)
      [a2, a2+48)         : W2 = block-diag(wa2, wv2)   (cols 0..a_dim)
      [a2+48]             : b2 = [ba2 | bv2]            (cols 0..a_dim)
    a2 = round_up(s_dim + 1, 8) so the layer-2 block starts on a sublane tile.
    """
    slab = slab_ref[...]                                  # [R, 128], one VMEM load
    w1 = slab[0:s_dim, 0:H]                               # [s_dim, 48]
    b1 = slab[s_dim:s_dim + 1, 0:H]                       # [1, 48]
    w2 = slab[a2:a2 + H, 0:a_dim + 1]                     # [48, a_dim+1]
    b2 = slab[a2 + H:a2 + H + 1, 0:a_dim + 1]             # [1, a_dim+1]

    x = x_ref[...]                                        # [B, s_dim] f32
    # layer 1 (both heads at once) + ReLU
    h = jnp.maximum(jnp.dot(x, w1, preferred_element_type=jnp.float32) + b1, 0.0)
    # layer 2: block-diagonal -> [logits || value]
    out = jnp.dot(h, w2, preferred_element_type=jnp.float32) + b2
    out_ref[...] = out.astype(out_ref.dtype)


# --------------------------------------------------------------------------
# Wrapper
# --------------------------------------------------------------------------
def a3c_forward(x, slab, s_dim, a_dim, *, batch_tile=256):
    """x: [B, s_dim] f32, slab: packed params (see pack_params).

    Returns (logits [B, a_dim], values [B, 1]).
    """
    B = x.shape[0]
    out_w = a_dim + 1
    a2 = _round_up(s_dim + 1, 8)
    kernel = functools.partial(a3c_fused_kernel, s_dim=s_dim, a_dim=a_dim, a2=a2)
    out_shape = jax.ShapeDtypeStruct((B, out_w), jnp.float32)

    if B >= 2 * batch_tile and B % batch_tile == 0:
        # Large batch: tile over B and mark it parallel (v7x: sharded over 2 TCs).
        out = pl.pallas_call(
            kernel,
            out_shape=out_shape,
            grid=(B // batch_tile,),
            in_specs=[
                pl.BlockSpec((batch_tile, s_dim), lambda i: (i, 0)),
                pl.BlockSpec(slab.shape, lambda i: (0, 0)),
            ],
            out_specs=pl.BlockSpec((batch_tile, out_w), lambda i: (i, 0)),
            compiler_params=pltpu.CompilerParams(
                dimension_semantics=("parallel",)),
        )(x, slab)
    else:
        # Small batch: no grid, whole-array VMEM blocks (2 input DMAs, 1 output).
        vmem = lambda: pl.BlockSpec(memory_space=pltpu.VMEM)
        out = pl.pallas_call(
            kernel,
            out_shape=out_shape,
            in_specs=[vmem(), vmem()],
            out_specs=vmem(),
        )(x, slab)

    return out[:, :a_dim], out[:, a_dim:]


# --------------------------------------------------------------------------
# Parameters (PyTorch nn.Linear semantics, stored transposed) + packing
# --------------------------------------------------------------------------
def init_params(key, s_dim, a_dim):
    ks = jax.random.split(key, 8)

    def linear(kw, kb, fan_in, fan_out):
        bound = 1.0 / jnp.sqrt(jnp.float32(fan_in))
        w = jax.random.uniform(kw, (fan_in, fan_out), jnp.float32, -bound, bound)
        b = jax.random.uniform(kb, (fan_out,), jnp.float32, -bound, bound)
        return w, b

    wa1, ba1 = linear(ks[0], ks[1], s_dim, H_A)
    wa2, ba2 = linear(ks[2], ks[3], H_A, a_dim)
    wv1, bv1 = linear(ks[4], ks[5], s_dim, H_V)
    wv2, bv2 = linear(ks[6], ks[7], H_V, 1)
    return dict(wa1=wa1, ba1=ba1, wa2=wa2, ba2=ba2,
                wv1=wv1, bv1=bv1, wv2=wv2, bv2=bv2)


def pack_params(p, s_dim, a_dim):
    """Pack all 8 tensors into one [R, 128] f32 slab (off-diagonal blocks zero)."""
    a2 = _round_up(s_dim + 1, 8)
    rows = a2 + _round_up(H + 1, 8)
    slab = jnp.zeros((rows, LANES), jnp.float32)
    # layer 1: fused [wa1 | wv1] plus bias row
    slab = slab.at[0:s_dim, 0:H_A].set(p["wa1"])
    slab = slab.at[0:s_dim, H_A:H].set(p["wv1"])
    slab = slab.at[s_dim, 0:H_A].set(p["ba1"])
    slab = slab.at[s_dim, H_A:H].set(p["bv1"])
    # layer 2: block-diagonal [wa2, 0; 0, wv2] plus bias row (rest stays zero)
    slab = slab.at[a2:a2 + H_A, 0:a_dim].set(p["wa2"])
    slab = slab.at[a2 + H_A:a2 + H, a_dim:a_dim + 1].set(p["wv2"])
    slab = slab.at[a2 + H, 0:a_dim].set(p["ba2"])
    slab = slab.at[a2 + H, a_dim:a_dim + 1].set(p["bv2"])
    return slab


def a3c_forward_ref(x, p):
    """Plain-JAX reference with PyTorch forward() semantics."""
    a = jnp.maximum(x @ p["wa1"] + p["ba1"], 0.0)
    logits = a @ p["wa2"] + p["ba2"]
    v = jnp.maximum(x @ p["wv1"] + p["bv1"], 0.0)
    values = v @ p["wv2"] + p["bv2"]
    return logits, values


# TODO(synk): choose_action (Categorical sampling) and loss() are host-side /
# training utilities, not part of the forward pass, and are not kernelized.

if __name__ == "__main__":
    key = jax.random.PRNGKey(0)
    k_param, k_x, k_x2 = jax.random.split(key, 3)

    s_dim, a_dim = 4, 2
    params = init_params(k_param, s_dim, a_dim)
    slab = pack_params(params, s_dim, a_dim)

    # --- small batch: no-grid, fully fused single-tile path ----------------
    B = 8
    x = jax.random.normal(k_x, (B, s_dim), jnp.float32)
    logits, values = a3c_forward(x, slab, s_dim, a_dim)
    logits = jax.block_until_ready(logits)
    values = jax.block_until_ready(values)

    logits_ref, values_ref = a3c_forward_ref(x, params)
    assert logits.shape == (B, a_dim) and values.shape == (B, 1)
    assert jnp.allclose(logits, logits_ref, atol=1e-4, rtol=1e-4)
    assert jnp.allclose(values, values_ref, atol=1e-4, rtol=1e-4)

    # --- large batch: exercises the parallel batch-grid path ---------------
    B2 = 512
    x2 = jax.random.normal(k_x2, (B2, s_dim), jnp.float32)
    logits2, values2 = a3c_forward(x2, slab, s_dim, a_dim, batch_tile=256)
    logits2 = jax.block_until_ready(logits2)
    values2 = jax.block_until_ready(values2)

    logits2_ref, values2_ref = a3c_forward_ref(x2, params)
    assert logits2.shape == (B2, a_dim) and values2.shape == (B2, 1)
    assert jnp.allclose(logits2, logits2_ref, atol=1e-4, rtol=1e-4)
    assert jnp.allclose(values2, values2_ref, atol=1e-4, rtol=1e-4)

    print("KERNEL_OK")
</pallas_src>

<mosaic_0001>
module attributes {stable_mosaic.version = 11 : i64} {
  func.func @a3c_fused_kernel(%arg0: memref<8x4xf32, #tpu.memory_space<vmem>>, %arg1: memref<64x128xf32, #tpu.memory_space<vmem>>, %arg2: memref<8x3xf32, #tpu.memory_space<vmem>>) attributes {dimension_semantics = [], scalar_prefetch = 0 : i64, scratch_operands = 0 : i64, tpu.core_type = #tpu.core_type<tc>} {
    %c0 = arith.constant 0 : index
    %c0_0 = arith.constant 0 : index
    %0 = vector.load %arg1[%c0, %c0_0] : memref<64x128xf32, #tpu.memory_space<vmem>>, vector<64x128xf32>
    %1 = vector.extract_strided_slice %0 {offsets = [0, 0], sizes = [4, 48], strides = [1, 1]} : vector<64x128xf32> to vector<4x48xf32>
    %2 = vector.extract_strided_slice %0 {offsets = [4, 0], sizes = [1, 48], strides = [1, 1]} : vector<64x128xf32> to vector<1x48xf32>
    %3 = vector.extract_strided_slice %0 {offsets = [8, 0], sizes = [48, 3], strides = [1, 1]} : vector<64x128xf32> to vector<48x3xf32>
    %4 = vector.extract_strided_slice %0 {offsets = [56, 0], sizes = [1, 3], strides = [1, 1]} : vector<64x128xf32> to vector<1x3xf32>
    %c0_1 = arith.constant 0 : index
    %c0_2 = arith.constant 0 : index
    %5 = vector.load %arg0[%c0_1, %c0_2] : memref<8x4xf32, #tpu.memory_space<vmem>>, vector<8x4xf32>
    %cst = arith.constant dense<0.000000e+00> : vector<8x48xf32>
    %6 = tpu.matmul %5, %1, %cst {dimension_numbers = #tpu.dot_dimension_numbers<[1], [0], [0], [1], [0, 0, 1, 1], [], []>} : vector<8x4xf32>, vector<4x48xf32>, vector<8x48xf32> -> vector<8x48xf32>
    %7 = vector.broadcast %2 : vector<1x48xf32> to vector<8x48xf32>
    %8 = arith.addf %6, %7 : vector<8x48xf32>
    %cst_3 = arith.constant 0.000000e+00 : f32
    %9 = vector.broadcast %cst_3 : f32 to vector<8x48xf32>
    %10 = arith.maximumf %8, %9 : vector<8x48xf32>
    %cst_4 = arith.constant dense<0.000000e+00> : vector<8x3xf32>
    %11 = tpu.matmul %10, %3, %cst_4 {dimension_numbers = #tpu.dot_dimension_numbers<[1], [0], [0], [1], [0, 0, 1, 1], [], []>} : vector<8x48xf32>, vector<48x3xf32>, vector<8x3xf32> -> vector<8x3xf32>
    %12 = vector.broadcast %4 : vector<1x3xf32> to vector<8x3xf32>
    %13 = arith.addf %11, %12 : vector<8x3xf32>
    %c0_5 = arith.constant 0 : index
    %c0_6 = arith.constant 0 : index
    %14 = vector.load %arg2[%c0_5, %c0_6] : memref<8x3xf32, #tpu.memory_space<vmem>>, vector<8x3xf32>
    tpu.vector_store %arg2[%c0_5, %c0_6], %13 {strides = array<i32>} : memref<8x3xf32, #tpu.memory_space<vmem>>, vector<8x3xf32>,
    return
  }
}

</mosaic_0001>

<llo_original>
// kernel: tpu_custom_call.1
$region0: #{tpu_custom_call.1}
  #allocation0 [shape = 'u32[]', space=smem, size = 0x4, offset = 0x4, fixed_abs, tag = 'smem constant byte address 0x4 - core index']
  #allocation1 [shape = 'u32[72,128]{1,0:T(1,128)}', space=vmem, size = 0x9000, scoped, tag = 'internal scratch']
  %s0 = inlined_call_operand.vmem [shape: f32[8,4], index: 0, kind: input, shape index: {}]
  %s1 = inlined_call_operand.hbm [shape: f32[64,128], index: 1, kind: input, shape index: {}]
  %s2 = inlined_call_operand.vmem [shape: f32[8,3], index: 2, kind: output, shape index: {}]
  %s3 = sld [smem:[#allocation0]]
  $region22: #{tpu_custom_call.1} parent=0
    _
  %s5 = ssub.s32 1, %s3
  %s6 = scalar_select 0, %s5, %s3
  $region1: #{tpu_custom_call.1} parent=0
    #allocation2 [shape = 'u8[32768]{0}', space=vmem, size = 0x8000, scoped, tag = 'input window, operand 1, single buffered']
    #allocation3 [shape = 's32[1]{0}', space=sflag, size = 0x4, scoped, tag = 'scoped memory for tpu_custom_call.1']
    %7 = vsyncpa [#allocation3], 0
    // Predicated region
    $region2: #{tpu_custom_call.1} parent=1 // pred_check
      _
    $region3: #{tpu_custom_call.1} parent=1 // pred_check_branch
      %9 = sbr.rel (0) target = $region5
    $region4: #{tpu_custom_call.1} parent=1 // pred_region
      _
    $region5: #{tpu_custom_call.1} parent=1 // pred_fallthru
      _
    // Predicated region
    $region6: #{tpu_custom_call.1} parent=1 // pred_check
      _
    $region7: #{tpu_custom_call.1} parent=1 // pred_check_branch
      %11 = sbr.rel (0) target = $region9
    $region8: #{tpu_custom_call.1} parent=1 // pred_region
      %13 = vsyncadd [#allocation3], 0
      %s14 = sshll.u32 %s1, 4
      %s15 = int_to_ptr.hbm [resolvable:$true] %s14
      %s16 = sshll.u32 [#allocation2], 4
      %s17 = int_to_ptr.vmem [resolvable:$true] %s16
      %22 = dma.hbm_to_vmem [thread:$0]  %s15, 1024, %s17, [#allocation3], 128, 128, 8
    $region9: #{tpu_custom_call.1} parent=1 // pred_fallthru
      _
    // Predicated region
    $region10: #{tpu_custom_call.1} parent=1 // pred_check
      _
    $region11: #{tpu_custom_call.1} parent=1 // pred_check_branch
      %24 = sbr.rel (0) target = $region13
    $region12: #{tpu_custom_call.1} parent=1 // pred_region
      %26 = dma.done [#allocation3], 1024
    $region13: #{tpu_custom_call.1} parent=1 // pred_fallthru
      _
    %v27 = vld [vmem:[#allocation2] sm:$0xff]
    %v28 = vld [vmem:[#allocation2 + $0x8] sm:$0xff]
    %v29 = vld [vmem:[#allocation2 + $0x10] sm:$0xff]
    %v30 = vld [vmem:[#allocation2 + $0x18] sm:$0xff]
    %v31 = vld [vmem:[#allocation2 + $0x20] sm:$0xff]
    %v32 = vld [vmem:[#allocation2 + $0x28] sm:$0xff]
    %v33 = vld [vmem:[#allocation2 + $0x30] sm:$0xff]
    %v34 = vld [vmem:[#allocation2 + $0x38] sm:$0xff]
    %v35 = vld [vmem:[%s0] sm:$0xff]
    %v36 = vperm.slane %v27, 4
    %vm37 = vcmask 31744
    %v39 = vsel %vm37, %v35, 0
    %vm41 = vcmask 1043456
    %v43 = vsel %vm41, %v27, 0
    %45 = vmatpush.msra.mxu0 0.0
    %46 = vmatpush.msra.mxu0 0.0
    %47 = vmatpush.msra.mxu0 0.0
    %48 = vmatpush.msra.mxu0 0.0
    %49 = vmatpush.msra.mxu0 0.0
    %50 = vmatpush.msra.mxu0 0.0
    %51 = vmatpush.msra.mxu0 0.0
    %52 = vmatpush.msra.mxu0 0.0
    %53 = vmatpush.msra.mxu0 0.0
    %54 = vmatpush.msra.mxu0 0.0
    %55 = vmatpush.msra.mxu0 0.0
    %56 = vmatpush.msra.mxu0 0.0
    %57 = vmatpush.msra.mxu0 0.0
    %58 = vmatpush.msra.mxu0 0.0
    %59 = vmatpush.msra.mxu0 0.0
    %60 = vmatpush.msra.mxu0 %v43
    %61 = vmatmul.f32.gmra.mxu0 %v39
    %v62 = vpop.f32.mrf.mxu0
    %v63 = vadd.f32 %v36, %v62
    %64 = vdwg.mxu0
    %v65 = vmax.f32 %v63, 0.0
    %v66 = vperm.slane %v34, 0
    %vm67 = vcmask 392192
    %v69 = vsel %vm67, %v65, 0
    %71 = vmatpush.msra.mxu0 0.0
    %72 = vmatpush.msra.mxu0 0.0
    %73 = vmatpush.msra.mxu0 0.0
    %74 = vmatpush.msra.mxu0 0.0
    %75 = vmatpush.msra.mxu0 0.0
    %76 = vmatpush.msra.mxu0 0.0
    %77 = vmatpush.msra.mxu0 0.0
    %78 = vmatpush.msra.mxu0 0.0
    %79 = vmatpush.msra.mxu0 0.0
    %80 = vmatpush.msra.mxu0 0.0
    %81 = vmatpush.msra.mxu0 %v33
    %82 = vmatpush.msra.mxu0 %v32
    %83 = vmatpush.msra.mxu0 %v31
    %84 = vmatpush.msra.mxu0 %v30
    %85 = vmatpush.msra.mxu0 %v29
    %86 = vmatpush.msra.mxu0 %v28
    %87 = vmatmul.f32.gmra.mxu0 %v69
    %v88 = vpop.f32.mrf.mxu0
    %v89 = vadd.f32 %v66, %v88
    %90 = vdwg.mxu0
    %vm91 = vcmask 23552
    %92 = vst.msk [vmem:[%s2] sm:$0xff] %vm91, %v89
    // Predicated region
    $region14: #{tpu_custom_call.1} parent=1 // pred_check
      _
    $region15: #{tpu_custom_call.1} parent=1 // pred_check_branch
      %94 = sbr.rel (0) target = $region17
    $region16: #{tpu_custom_call.1} parent=1 // pred_region
      _
    $region17: #{tpu_custom_call.1} parent=1 // pred_fallthru
      _
    // Predicated region
    $region18: #{tpu_custom_call.1} parent=1 // pred_check
      _
    $region19: #{tpu_custom_call.1} parent=1 // pred_check_branch
      %96 = sbr.rel (0) target = $region21
    $region20: #{tpu_custom_call.1} parent=1 // pred_region
      _
    $region21: #{tpu_custom_call.1} parent=1 // pred_fallthru
      _
    %97 = vsyncpa [#allocation3], 1

</llo_original>
